<compile_context>
chip_gen: v6e
topology: v6e:2x2x1
jax: 0.10.0
libtpu: 0.0.40
codegen_flags: <defaults>
</compile_context>

<pallas_src>
import functools

import jax
import jax.numpy as jnp
import numpy as np
from jax import lax
from jax.experimental import pallas as pl
from jax.experimental.pallas import tpu as pltpu


# ---------------------------------------------------------------------------
# Pallas kernel: one batch-block per grid step.
#   img_ref  : (Bt, L, D_img)          image features (bf16 or f32)
#   t_ref    : (Bt, 2Hp) f32           text GatedTanh * w_lc, both branches
#   w_img_ref: (D_img, 4Hp)            columns [fc1 | fc2 | gate1 | gate2]
#   b_img_ref: (1, 4Hp) f32
#   out_ref  : (Bt, L)  f32            softmax over L
# ---------------------------------------------------------------------------
def _dpa_kernel(img_ref, t_ref, w_img_ref, b_img_ref, out_ref, *,
                approx_recip=False):
    Bt, L, D_img = img_ref.shape
    H4 = w_img_ref.shape[1]
    H2 = H4 // 2                         # 2*Hp, always a multiple of 128

    # One lane-dense MXU matmul covers fc+gate of both attention branches for
    # the whole batch-block.  bf16 operands on the fast path, f32 accumulate.
    img = img_ref[...].reshape(Bt * L, D_img)
    proj = (jnp.dot(img, w_img_ref[...], preferred_element_type=jnp.float32)
            + b_img_ref[...])            # (Bt*L, 4Hp) f32

    t = t_ref[...]                       # (Bt, 2Hp) f32

    # Chunk the hidden axis so the GatedTanh / multiply / reduce working set
    # stays small instead of a live (Bt*L, 2Hp) f32 intermediate.  Chunk size
    # is a multiple of 128 that divides H2, so every slice is lane-aligned
    # (static slices -> zero-cost views).
    if H2 <= 512:
        chunk = H2
    elif H2 % 512 == 0:
        chunk = 512
    elif H2 % 256 == 0:
        chunk = 256
    else:
        chunk = 128
    n_chunks = H2 // chunk

    # TODO(synk): dropout on the joint feature omitted (eval-mode identity).
    raw = jnp.zeros((Bt, L), jnp.float32)
    for c in range(n_chunks):            # static, fully unrolled at trace time
        off = c * chunk
        fc_c = proj[:, off:off + chunk]                  # fc   columns chunk
        gate_c = proj[:, H2 + off:H2 + off + chunk]      # gate columns chunk
        g = (jnp.tanh(fc_c) * jax.nn.sigmoid(gate_c)).reshape(Bt, L, chunk)
        raw = raw + jnp.sum(g * t[:, None, off:off + chunk], axis=-1)

    # softmax over the location axis (PyTorch dim=1).  (blc1+blc2) is constant
    # over L and cancels exactly under the max-subtraction, so it is dropped.
    m = jnp.max(raw, axis=-1, keepdims=True)
    e = jnp.exp(raw - m)
    s = jnp.sum(e, axis=-1, keepdims=True)
    out_ref[...] = (e * pl.reciprocal(s, approx=approx_recip)).astype(out_ref.dtype)


def _pick_block_b(B, L, target_rows=512, max_block_b=64):
    """Batch-block size.

    * block_b * L >= ~256 rows so the image matmul fills the 256-row MXU on
      v6e/v7x (v5e's 128-row MXU fills even sooner).
    * block_b is a multiple of 8 (sublane-aligned t/out blocks) unless the
      whole batch is <= 8 (then block_b == B, a full-dim block).
    * keep >= 2 grid steps when B permits so v7x's second TensorCore gets
      work under dimension_semantics=("parallel",).
    """
    if B <= 8:
        return B
    bb = -(-target_rows // L)                       # ceil(target_rows / L)
    bb = min(max(bb, 8), max_block_b, ((B + 7) // 8) * 8)
    bb = ((bb + 7) // 8) * 8                        # round up to multiple of 8
    while bb > 8 and -(-B // bb) < 2:               # ensure >= 2 grid steps
        bb -= 8
    return bb


# ---------------------------------------------------------------------------
# Wrapper
# ---------------------------------------------------------------------------
def double_project_attention(image_feat, question_embedding, params,
                             block_b=None, matmul_dtype=jnp.bfloat16):
    B, L, D_img = image_feat.shape
    H = params["w_lc"].shape[1]
    out_dtype = image_feat.dtype

    # --- pad per-branch hidden so the fc/gate split (at 2Hp) and all chunk
    #     slices land on 128-lane boundaries:  Hp % 64 == 0  ->  2Hp % 128 == 0
    Hp = ((H + 63) // 64) * 64

    def pad_w(w):   # (D, H) -> (D, Hp); zero pad -> tanh(0)=0 kills padded cols
        return jnp.pad(w, ((0, 0), (0, Hp - H)))

    def pad_b(b):   # (1, H) -> (1, Hp)
        return jnp.pad(b, ((0, 0), (0, Hp - H)))

    # --- fused image-branch weight: columns [fc1 | fc2 | gate1 | gate2] -----
    w_img_all = jnp.concatenate(
        [pad_w(params["w_img_fc"][0]), pad_w(params["w_img_fc"][1]),
         pad_w(params["w_img_gate"][0]), pad_w(params["w_img_gate"][1])],
        axis=1)                                                    # (D_img, 4Hp)
    b_img_all = jnp.concatenate(
        [pad_b(params["b_img_fc"][0]), pad_b(params["b_img_fc"][1]),
         pad_b(params["b_img_gate"][0]), pad_b(params["b_img_gate"][1])],
        axis=1).astype(jnp.float32)                                # (1, 4Hp)

    # --- text branch hoisted out of the kernel (tiny, badly shaped for the
    #     MXU): GatedTanh(question) * w_lc, once per batch, in plain XLA -----
    q = question_embedding.astype(jnp.float32)
    t_parts = []
    for a in range(2):
        tg = (jnp.tanh(q @ params["w_txt_fc"][a] + params["b_txt_fc"][a]) *
              jax.nn.sigmoid(q @ params["w_txt_gate"][a] + params["b_txt_gate"][a]))
        tg = tg * params["w_lc"][a, :, 0][None, :]                 # fold lc weight
        t_parts.append(jnp.pad(tg, ((0, 0), (0, Hp - H))))
    t = jnp.concatenate(t_parts, axis=1).astype(jnp.float32)       # (B, 2Hp)
    # (blc1 + blc2) is constant over L -> cancels in the softmax; dropped.

    # --- bf16 MXU operands by default (f32 accumulation inside the kernel) --
    img = image_feat
    if matmul_dtype is not None:
        img = img.astype(matmul_dtype)
        w_img_all = w_img_all.astype(matmul_dtype)
    approx_recip = matmul_dtype is not None     # keep the f32 path exact

    # --- batch blocking + padding -------------------------------------------
    if block_b is None:
        block_b = _pick_block_b(B, L)
    Bpad = ((B + block_b - 1) // block_b) * block_b
    if Bpad != B:
        img = jnp.pad(img, ((0, Bpad - B), (0, 0), (0, 0)))
        t = jnp.pad(t, ((0, Bpad - B), (0, 0)))

    def _call(single_buffer_weights):
        # Constant-index weight/bias blocks do not need double-buffering.
        wkw = ({"pipeline_mode": pl.Buffered(1)} if single_buffer_weights
               else {})
        in_specs = [
            pl.BlockSpec((block_b, L, D_img), lambda b: (b, 0, 0)),
            pl.BlockSpec((block_b, 2 * Hp), lambda b: (b, 0)),
            pl.BlockSpec((D_img, 4 * Hp), lambda b: (0, 0), **wkw),
            pl.BlockSpec((1, 4 * Hp), lambda b: (0, 0), **wkw),
        ]
        out_spec = pl.BlockSpec((block_b, L), lambda b: (b, 0))
        return pl.pallas_call(
            functools.partial(_dpa_kernel, approx_recip=approx_recip),
            out_shape=jax.ShapeDtypeStruct((Bpad, L), jnp.float32),
            grid=(Bpad // block_b,),
            in_specs=in_specs,
            out_specs=out_spec,
            compiler_params=pltpu.CompilerParams(
                dimension_semantics=("parallel",),
                vmem_limit_bytes=64 * 1024 * 1024,
            ),
        )(img, t, w_img_all, b_img_all)

    try:
        attn = _call(True)
    except Exception:
        # TODO(synk): pipeline_mode=pl.Buffered(1) unsupported on this jax
        # build — fall back to default double-buffered weight blocks.
        attn = _call(False)

    attn = attn[:B]
    # expand_as(image_feat) is a view in PyTorch; broadcast lazily here instead
    # of materializing D_img-wide masked stores inside the kernel.
    return jnp.broadcast_to(attn[:, :, None], (B, L, D_img)).astype(out_dtype)


# ---------------------------------------------------------------------------
# Pure-JAX reference (mirrors the PyTorch module in eval mode)
# ---------------------------------------------------------------------------
def reference(image_feat, question_embedding, params):
    def gated_tanh(x, w, b, wg, bg):
        return jnp.tanh(x @ w + b) * jax.nn.sigmoid(x @ wg + bg)

    raws = []
    for a in range(2):
        img_fa = gated_tanh(
            image_feat,
            params["w_img_fc"][a], params["b_img_fc"][a, 0],
            params["w_img_gate"][a], params["b_img_gate"][a, 0],
        )                                                   # (B, L, H)
        q_fa = gated_tanh(
            question_embedding,
            params["w_txt_fc"][a], params["b_txt_fc"][a, 0],
            params["w_txt_gate"][a], params["b_txt_gate"][a, 0],
        )                                                   # (B, H)
        joint = img_fa * q_fa[:, None, :]
        raw = joint @ params["w_lc"][a] + params["b_lc"][a, 0]   # (B, L, 1)
        raws.append(raw)
    raw = raws[0] + raws[1]
    attn = jax.nn.softmax(raw, axis=1)                      # (B, L, 1)
    return jnp.broadcast_to(attn, image_feat.shape)


# ---------------------------------------------------------------------------
# Main
# ---------------------------------------------------------------------------
if __name__ == "__main__":
    B, L = 2, 16
    D_IMG, D_TXT, H = 32, 24, 32

    key = jax.random.PRNGKey(0)
    keys = jax.random.split(key, 14)

    def init(k, shape, fan_in):
        bound = 1.0 / np.sqrt(fan_in)
        return jax.random.uniform(k, shape, jnp.float32, -bound, bound)

    # leading dim of 2 = [att1, att2]
    params = {
        "w_img_fc":   init(keys[0], (2, D_IMG, H), D_IMG),
        "b_img_fc":   init(keys[1], (2, 1, H), D_IMG),
        "w_img_gate": init(keys[2], (2, D_IMG, H), D_IMG),
        "b_img_gate": init(keys[3], (2, 1, H), D_IMG),
        "w_txt_fc":   init(keys[4], (2, D_TXT, H), D_TXT),
        "b_txt_fc":   init(keys[5], (2, 1, H), D_TXT),
        "w_txt_gate": init(keys[6], (2, D_TXT, H), D_TXT),
        "b_txt_gate": init(keys[7], (2, 1, H), D_TXT),
        "w_lc":       init(keys[8], (2, H, 1), H),
        "b_lc":       init(keys[9], (2, 1, 1), H),
    }

    image_feat = jax.random.normal(keys[10], (B, L, D_IMG), jnp.float32)
    question_embedding = jax.random.normal(keys[11], (B, D_TXT), jnp.float32)

    ref = reference(image_feat, question_embedding, params)

    # Exact path (f32 MXU operands) — tight tolerance.
    out_f32 = double_project_attention(image_feat, question_embedding, params,
                                       matmul_dtype=None)
    out_f32 = jax.block_until_ready(out_f32)
    np.testing.assert_allclose(np.asarray(out_f32), np.asarray(ref),
                               rtol=2e-5, atol=2e-5)

    # Default fast path (bf16 MXU operands, f32 accumulation) — loose tolerance.
    out_fast = double_project_attention(image_feat, question_embedding, params)
    out_fast = jax.block_until_ready(out_fast)
    np.testing.assert_allclose(np.asarray(out_fast), np.asarray(ref),
                               rtol=5e-2, atol=5e-3)

    print("KERNEL_OK")
</pallas_src>

<mosaic_0001>
module attributes {stable_mosaic.version = 11 : i64} {
  func.func @_dpa_kernel(%arg0: i32, %arg1: memref<2x16x32xf32, #tpu.memory_space<vmem>>, %arg2: memref<2x128xf32, #tpu.memory_space<vmem>>, %arg3: memref<32x256xf32, #tpu.memory_space<vmem>>, %arg4: memref<1x256xf32, #tpu.memory_space<vmem>>, %arg5: memref<2x16xf32, #tpu.memory_space<vmem>>) attributes {dimension_semantics = [#tpu.dimension_semantics<parallel>], iteration_bounds = array<i64: 1>, scalar_prefetch = 0 : i64, scratch_operands = 0 : i64, tpu.core_type = #tpu.core_type<tc>, window_params = [{transform_indices = @transform_0, window_bounds = array<i64: 2, 16, 32>}, {transform_indices = @transform_1, window_bounds = array<i64: 2, 128>}, {pipeline_mode = #tpu.pipeline_mode<synchronous>, transform_indices = @transform_2, window_bounds = array<i64: 32, 256>}, {pipeline_mode = #tpu.pipeline_mode<synchronous>, transform_indices = @transform_3, window_bounds = array<i64: 1, 256>}, {transform_indices = @transform_4, window_bounds = array<i64: 2, 16>}]} {
    %c0 = arith.constant 0 : index
    %c0_0 = arith.constant 0 : index
    %c0_1 = arith.constant 0 : index
    %0 = vector.load %arg1[%c0, %c0_0, %c0_1] : memref<2x16x32xf32, #tpu.memory_space<vmem>>, vector<2x16x32xf32>
    %1 = vector.shape_cast %0 : vector<2x16x32xf32> to vector<32x32xf32>
    %c0_2 = arith.constant 0 : index
    %c0_3 = arith.constant 0 : index
    %2 = vector.load %arg3[%c0_2, %c0_3] : memref<32x256xf32, #tpu.memory_space<vmem>>, vector<32x256xf32>
    %cst = arith.constant dense<0.000000e+00> : vector<32x256xf32>
    %3 = tpu.matmul %1, %2, %cst {dimension_numbers = #tpu.dot_dimension_numbers<[1], [0], [0], [1], [0, 0, 1, 1], [], []>} : vector<32x32xf32>, vector<32x256xf32>, vector<32x256xf32> -> vector<32x256xf32>
    %c0_4 = arith.constant 0 : index
    %c0_5 = arith.constant 0 : index
    %4 = vector.load %arg4[%c0_4, %c0_5] : memref<1x256xf32, #tpu.memory_space<vmem>>, vector<1x256xf32>
    %5 = vector.broadcast %4 : vector<1x256xf32> to vector<32x256xf32>
    %6 = arith.addf %3, %5 : vector<32x256xf32>
    %c0_6 = arith.constant 0 : index
    %c0_7 = arith.constant 0 : index
    %7 = vector.load %arg2[%c0_6, %c0_7] : memref<2x128xf32, #tpu.memory_space<vmem>>, vector<2x128xf32>
    %cst_8 = arith.constant 0.000000e+00 : f32
    %8 = vector.broadcast %cst_8 : f32 to vector<2x16xf32>
    %9 = vector.extract_strided_slice %6 {offsets = [0, 0], sizes = [32, 128], strides = [1, 1]} : vector<32x256xf32> to vector<32x128xf32>
    %10 = vector.extract_strided_slice %6 {offsets = [0, 128], sizes = [32, 128], strides = [1, 1]} : vector<32x256xf32> to vector<32x128xf32>
    %11 = math.tanh %9 : vector<32x128xf32>
    %12 = arith.negf %10 : vector<32x128xf32>
    %13 = math.exp %12 : vector<32x128xf32>
    %cst_9 = arith.constant 1.000000e+00 : f32
    %14 = vector.broadcast %cst_9 : f32 to vector<32x128xf32>
    %15 = arith.addf %14, %13 : vector<32x128xf32>
    %16 = arith.divf %14, %15 : vector<32x128xf32>
    %17 = arith.mulf %11, %16 : vector<32x128xf32>
    %18 = vector.shape_cast %17 : vector<32x128xf32> to vector<2x16x128xf32>
    %19 = vector.shape_cast %7 : vector<2x128xf32> to vector<2x1x128xf32>
    %20 = vector.broadcast %19 : vector<2x1x128xf32> to vector<2x16x128xf32>
    %21 = arith.mulf %18, %20 : vector<2x16x128xf32>
    %cst_10 = arith.constant dense<0.000000e+00> : vector<2x16xf32>
    %22 = vector.multi_reduction <add>, %21, %cst_10 [2] : vector<2x16x128xf32> to vector<2x16xf32>
    %23 = arith.addf %8, %22 : vector<2x16xf32>
    %cst_11 = arith.constant dense<0xFF800000> : vector<2xf32>
    %24 = vector.multi_reduction <maximumf>, %23, %cst_11 [1] : vector<2x16xf32> to vector<2xf32>
    %25 = vector.shape_cast %24 : vector<2xf32> to vector<2x1xf32>
    %26 = vector.broadcast %25 : vector<2x1xf32> to vector<2x16xf32>
    %27 = arith.subf %23, %26 : vector<2x16xf32>
    %28 = math.exp %27 : vector<2x16xf32>
    %cst_12 = arith.constant dense<0.000000e+00> : vector<2xf32>
    %29 = vector.multi_reduction <add>, %28, %cst_12 [1] : vector<2x16xf32> to vector<2xf32>
    %30 = vector.shape_cast %29 : vector<2xf32> to vector<2x1xf32>
    %31 = tpu.reciprocal %30 : vector<2x1xf32> -> vector<2x1xf32>
    %32 = vector.broadcast %31 : vector<2x1xf32> to vector<2x16xf32>
    %33 = arith.mulf %28, %32 : vector<2x16xf32>
    %c0_13 = arith.constant 0 : index
    %c0_14 = arith.constant 0 : index
    %34 = vector.load %arg5[%c0_13, %c0_14] : memref<2x16xf32, #tpu.memory_space<vmem>>, vector<2x16xf32>
    tpu.vector_store %arg5[%c0_13, %c0_14], %33 {strides = array<i32>} : memref<2x16xf32, #tpu.memory_space<vmem>>, vector<2x16xf32>,
    return
  }
  func.func @transform_0(%arg0: i32) -> (i32, i32, i32) {
    %c0_i32 = arith.constant 0 : i32
    %c0_i32_0 = arith.constant 0 : i32
    %c0_i32_1 = arith.constant 0 : i32
    return %arg0, %c0_i32, %c0_i32_0 : i32, i32, i32
  }
  func.func @transform_1(%arg0: i32) -> (i32, i32) {
    %c0_i32 = arith.constant 0 : i32
    %c0_i32_0 = arith.constant 0 : i32
    return %arg0, %c0_i32 : i32, i32
  }
  func.func @transform_2(%arg0: i32) -> (i32, i32) {
    %c0_i32 = arith.constant 0 : i32
    %c0_i32_0 = arith.constant 0 : i32
    %c0_i32_1 = arith.constant 0 : i32
    return %c0_i32, %c0_i32_0 : i32, i32
  }
  func.func @transform_3(%arg0: i32) -> (i32, i32) {
    %c0_i32 = arith.constant 0 : i32
    %c0_i32_0 = arith.constant 0 : i32
    %c0_i32_1 = arith.constant 0 : i32
    return %c0_i32, %c0_i32_0 : i32, i32
  }
  func.func @transform_4(%arg0: i32) -> (i32, i32) {
    %c0_i32 = arith.constant 0 : i32
    %c0_i32_0 = arith.constant 0 : i32
    return %arg0, %c0_i32 : i32, i32
  }
}

module attributes {stable_mosaic.version = 11 : i64} {
  func.func @_dpa_kernel(%arg0: i32, %arg1: memref<2x16x32xf32, #tpu.memory_space<vmem>>, %arg2: memref<2x128xf32, #tpu.memory_space<vmem>>, %arg3: memref<32x256xf32, #tpu.memory_space<vmem>>, %arg4: memref<1x256xf32, #tpu.memory_space<vmem>>, %arg5: memref<2x16xf32, #tpu.memory_space<vmem>>) attributes {dimension_semantics = [#tpu.dimension_semantics<parallel>], iteration_bounds = array<i64: 1>, scalar_prefetch = 0 : i64, scratch_operands = 0 : i64, tpu.core_type = #tpu.core_type<tc>, window_params = [{transform_indices = @transform_0, window_bounds = array<i64: 2, 16, 32>}, {transform_indices = @transform_1, window_bounds = array<i64: 2, 128>}, {pipeline_mode = #tpu.pipeline_mode<synchronous>, transform_indices = @transform_2, window_bounds = array<i64: 32, 256>}, {pipeline_mode = #tpu.pipeline_mode<synchronous>, transform_indices = @transform_3, window_bounds = array<i64: 1, 256>}, {transform_indices = @transform_4, window_bounds = array<i64: 2, 16>}]} {
    %c0 = arith.constant 0 : index
    %c0_0 = arith.constant 0 : index
    %c0_1 = arith.constant 0 : index
    %0 = vector.load %arg1[%c0, %c0_0, %c0_1] : memref<2x16x32xf32, #tpu.memory_space<vmem>>, vector<2x16x32xf32>
    %1 = vector.shape_cast %0 : vector<2x16x32xf32> to vector<32x32xf32>
    %c0_2 = arith.constant 0 : index
    %c0_3 = arith.constant 0 : index
    %2 = vector.load %arg3[%c0_2, %c0_3] : memref<32x256xf32, #tpu.memory_space<vmem>>, vector<32x256xf32>
    %cst = arith.constant dense<0.000000e+00> : vector<32x256xf32>
    %3 = tpu.matmul %1, %2, %cst {dimension_numbers = #tpu.dot_dimension_numbers<[1], [0], [0], [1], [0, 0, 1, 1], [], []>} : vector<32x32xf32>, vector<32x256xf32>, vector<32x256xf32> -> vector<32x256xf32>
    %c0_4 = arith.constant 0 : index
    %c0_5 = arith.constant 0 : index
    %4 = vector.load %arg4[%c0_4, %c0_5] : memref<1x256xf32, #tpu.memory_space<vmem>>, vector<1x256xf32>
    %5 = vector.broadcast %4 : vector<1x256xf32> to vector<32x256xf32>
    %6 = arith.addf %3, %5 : vector<32x256xf32>
    %c0_6 = arith.constant 0 : index
    %c0_7 = arith.constant 0 : index
    %7 = vector.load %arg2[%c0_6, %c0_7] : memref<2x128xf32, #tpu.memory_space<vmem>>, vector<2x128xf32>
    %cst_8 = arith.constant 0.000000e+00 : f32
    %8 = vector.broadcast %cst_8 : f32 to vector<2x16xf32>
    %9 = vector.extract_strided_slice %6 {offsets = [0, 0], sizes = [32, 128], strides = [1, 1]} : vector<32x256xf32> to vector<32x128xf32>
    %10 = vector.extract_strided_slice %6 {offsets = [0, 128], sizes = [32, 128], strides = [1, 1]} : vector<32x256xf32> to vector<32x128xf32>
    %11 = math.tanh %9 : vector<32x128xf32>
    %12 = arith.negf %10 : vector<32x128xf32>
    %13 = math.exp %12 : vector<32x128xf32>
    %cst_9 = arith.constant 1.000000e+00 : f32
    %14 = vector.broadcast %cst_9 : f32 to vector<32x128xf32>
    %15 = arith.addf %14, %13 : vector<32x128xf32>
    %16 = arith.divf %14, %15 : vector<32x128xf32>
    %17 = arith.mulf %11, %16 : vector<32x128xf32>
    %18 = vector.shape_cast %17 : vector<32x128xf32> to vector<2x16x128xf32>
    %19 = vector.shape_cast %7 : vector<2x128xf32> to vector<2x1x128xf32>
    %20 = vector.broadcast %19 : vector<2x1x128xf32> to vector<2x16x128xf32>
    %21 = arith.mulf %18, %20 : vector<2x16x128xf32>
    %cst_10 = arith.constant dense<0.000000e+00> : vector<2x16xf32>
    %22 = vector.multi_reduction <add>, %21, %cst_10 [2] : vector<2x16x128xf32> to vector<2x16xf32>
    %23 = arith.addf %8, %22 : vector<2x16xf32>
    %cst_11 = arith.constant dense<0xFF800000> : vector<2xf32>
    %24 = vector.multi_reduction <maximumf>, %23, %cst_11 [1] : vector<2x16xf32> to vector<2xf32>
    %25 = vector.shape_cast %24 : vector<2xf32> to vector<2x1xf32>
    %26 = vector.broadcast %25 : vector<2x1xf32> to vector<2x16xf32>
    %27 = arith.subf %23, %26 : vector<2x16xf32>
    %28 = math.exp %27 : vector<2x16xf32>
    %cst_12 = arith.constant dense<0.000000e+00> : vector<2xf32>
    %29 = vector.multi_reduction <add>, %28, %cst_12 [1] : vector<2x16xf32> to vector<2xf32>
    %30 = vector.shape_cast %29 : vector<2xf32> to vector<2x1xf32>
    %31 = tpu.reciprocal %30 : vector<2x1xf32> -> vector<2x1xf32>
    %32 = vector.broadcast %31 : vector<2x1xf32> to vector<2x16xf32>
    %33 = arith.mulf %28, %32 : vector<2x16xf32>
    %c0_13 = arith.constant 0 : index
    %c0_14 = arith.constant 0 : index
    %34 = vector.load %arg5[%c0_13, %c0_14] : memref<2x16xf32, #tpu.memory_space<vmem>>, vector<2x16xf32>
    tpu.vector_store %arg5[%c0_13, %c0_14], %33 {strides = array<i32>} : memref<2x16xf32, #tpu.memory_space<vmem>>, vector<2x16xf32>,
    return
  }
  func.func @transform_0(%arg0: i32) -> (i32, i32, i32) {
    %c0_i32 = arith.constant 0 : i32
    %c0_i32_0 = arith.constant 0 : i32
    %c0_i32_1 = arith.constant 0 : i32
    return %arg0, %c0_i32, %c0_i32_0 : i32, i32, i32
  }
  func.func @transform_1(%arg0: i32) -> (i32, i32) {
    %c0_i32 = arith.constant 0 : i32
    %c0_i32_0 = arith.constant 0 : i32
    return %arg0, %c0_i32 : i32, i32
  }
  func.func @transform_2(%arg0: i32) -> (i32, i32) {
    %c0_i32 = arith.constant 0 : i32
    %c0_i32_0 = arith.constant 0 : i32
    %c0_i32_1 = arith.constant 0 : i32
    return %c0_i32, %c0_i32_0 : i32, i32
  }
  func.func @transform_3(%arg0: i32) -> (i32, i32) {
    %c0_i32 = arith.constant 0 : i32
    %c0_i32_0 = arith.constant 0 : i32
    %c0_i32_1 = arith.constant 0 : i32
    return %c0_i32, %c0_i32_0 : i32, i32
  }
  func.func @transform_4(%arg0: i32) -> (i32, i32) {
    %c0_i32 = arith.constant 0 : i32
    %c0_i32_0 = arith.constant 0 : i32
    return %arg0, %c0_i32 : i32, i32
  }
}

</mosaic_0001>

<llo_original>
// kernel: tpu_custom_call.1
$region0: #{tpu_custom_call.1}
  #allocation0 [shape = 'u32[]', space=smem, size = 0x4, offset = 0x4, fixed_abs, tag = 'smem constant byte address 0x4 - core index']
  #allocation1 [shape = 'u32[144,128]{1,0:T(1,128)}', space=vmem, size = 0x12000, scoped, tag = 'internal scratch']
  %s0 = inlined_call_operand.hbm [shape: f32[2,16,32], index: 0, kind: input, shape index: {}]
  %s1 = inlined_call_operand.hbm [shape: f32[2,128], index: 1, kind: input, shape index: {}]
  %s2 = inlined_call_operand.hbm [shape: f32[32,256], index: 2, kind: input, shape index: {}]
  %s3 = inlined_call_operand.vmem [shape: f32[1,256], index: 3, kind: input, shape index: {}]
  %s4 = inlined_call_operand.hbm [shape: f32[2,16], index: 4, kind: output, shape index: {}]
  %s5 = sld [smem:[#allocation0]]
  $region38: #{tpu_custom_call.1} parent=0
    _
  %s7 = ssub.s32 1, %s5
  %s8 = scalar_select 0, %s7, %s5
  $region1: #{tpu_custom_call.1} parent=0
    #allocation2 [shape = 'u8[16384]{0}', space=vmem, size = 0x4000, scoped, tag = 'input window, operand 0, single buffered']
    #allocation3 [shape = 's32[1]{0}', space=sflag, size = 0x4, scoped, tag = 'scoped memory for tpu_custom_call.1']
    #allocation4 [shape = 's32[1]{0}', space=sflag, size = 0x4, scoped, tag = 'scoped memory for tpu_custom_call.1']
    #allocation5 [shape = 'u8[1024]{0}', space=vmem, size = 0x400, scoped, tag = 'input window, operand 1, single buffered']
    #allocation6 [shape = 's32[1]{0}', space=sflag, size = 0x4, scoped, tag = 'scoped memory for tpu_custom_call.1']
    #allocation7 [shape = 'u8[32768]{0}', space=vmem, size = 0x8000, scoped, tag = 'input window, operand 2, single buffered']
    #allocation8 [shape = 'u8[1024]{0}', space=vmem, size = 0x400, scoped, tag = 'output window, operand 0, single buffered']
    %9 = vsyncpa [#allocation3], 0
    %10 = vsyncpa [#allocation6], 0
    %11 = vsyncpa [#allocation4], 0
    // Predicated region
    $region2: #{tpu_custom_call.1} parent=1 // pred_check
      _
    $region3: #{tpu_custom_call.1} parent=1 // pred_check_branch
      %13 = sbr.rel (0) target = $region5
    $region4: #{tpu_custom_call.1} parent=1 // pred_region
      %s15 = ssub.s32 512, 512
      %16 = vsyncadd [#allocation3], %s15
      %s17 = sshll.u32 [#allocation2], 4
      %s18 = int_to_ptr.vmem [resolvable:$true] %s17
      %23 = dma.hbm_to_vmem [thread:$0]  %s0, 512, %s18, [#allocation3], 128, 128, 8
    $region5: #{tpu_custom_call.1} parent=1 // pred_fallthru
      _
    // Predicated region
    $region6: #{tpu_custom_call.1} parent=1 // pred_check
      _
    $region7: #{tpu_custom_call.1} parent=1 // pred_check_branch
      %25 = sbr.rel (0) target = $region9
    $region8: #{tpu_custom_call.1} parent=1 // pred_region
      %s27 = ssub.s32 32, 32
      %28 = vsyncadd [#allocation6], %s27
      %s30 = sshll.u32 [#allocation5], 4
      %s31 = int_to_ptr.vmem [resolvable:$true] %s30
      %33 = dma.hbm_to_vmem [thread:$0]  %s1, 32, %s31, [#allocation6]
    $region9: #{tpu_custom_call.1} parent=1 // pred_fallthru
      _
    // Predicated region
    $region10: #{tpu_custom_call.1} parent=1 // pred_check
      _
    $region11: #{tpu_custom_call.1} parent=1 // pred_check_branch
      %35 = sbr.rel (0) target = $region13
    $region12: #{tpu_custom_call.1} parent=1 // pred_region
      %s37 = ssub.s32 1024, 1024
      %38 = vsyncadd [#allocation6], %s37
      %s39 = sshll.u32 [#allocation7], 4
      %s40 = int_to_ptr.vmem [resolvable:$true] %s39
      %45 = dma.hbm_to_vmem [thread:$0]  %s2, 1024, %s40, [#allocation6], 256, 256, 16
    $region13: #{tpu_custom_call.1} parent=1 // pred_fallthru
      _
    // Predicated region
    $region14: #{tpu_custom_call.1} parent=1 // pred_check
      _
    $region15: #{tpu_custom_call.1} parent=1 // pred_check_branch
      %47 = sbr.rel (0) target = $region17
    $region16: #{tpu_custom_call.1} parent=1 // pred_region
      _
    $region17: #{tpu_custom_call.1} parent=1 // pred_fallthru
      _
    // Predicated region
    $region18: #{tpu_custom_call.1} parent=1 // pred_check
      _
    $region19: #{tpu_custom_call.1} parent=1 // pred_check_branch
      %49 = sbr.rel (0) target = $region21
    $region20: #{tpu_custom_call.1} parent=1 // pred_region
      %50 = dma.done [#allocation3], 512
    $region21: #{tpu_custom_call.1} parent=1 // pred_fallthru
      _
    // Predicated region
    $region22: #{tpu_custom_call.1} parent=1 // pred_check
      _
    $region23: #{tpu_custom_call.1} parent=1 // pred_check_branch
      %52 = sbr.rel (0) target = $region25
    $region24: #{tpu_custom_call.1} parent=1 // pred_region
      %53 = dma.done [#allocation6], 32
    $region25: #{tpu_custom_call.1} parent=1 // pred_fallthru
      _
    // Predicated region
    $region26: #{tpu_custom_call.1} parent=1 // pred_check
      _
    $region27: #{tpu_custom_call.1} parent=1 // pred_check_branch
      %55 = sbr.rel (0) target = $region29
    $region28: #{tpu_custom_call.1} parent=1 // pred_region
      %56 = dma.done [#allocation6], 1024
    $region29: #{tpu_custom_call.1} parent=1 // pred_fallthru
      _
    %v57 = vld [vmem:[#allocation2] sm:$0xff]
    %v58 = vld [vmem:[#allocation2 + $0x8] sm:$0xff]
    %v59 = vld [vmem:[#allocation2 + $0x10] sm:$0xff]
    %v60 = vld [vmem:[#allocation2 + $0x18] sm:$0xff]
    %v61 = vld [vmem:[#allocation7] sm:$0xff]
    %v62 = vld [vmem:[#allocation7 + $0x8] sm:$0xff]
    %v63 = vld [vmem:[#allocation7 + $0x10] sm:$0xff]
    %v64 = vld [vmem:[#allocation7 + $0x18] sm:$0xff]
    %v65 = vld [vmem:[#allocation7 + $0x20] sm:$0xff]
    %v66 = vld [vmem:[#allocation7 + $0x28] sm:$0xff]
    %v67 = vld [vmem:[#allocation7 + $0x30] sm:$0xff]
    %v68 = vld [vmem:[#allocation7 + $0x38] sm:$0xff]
    %v69 = vld [vmem:[%s3] sm:$0x3]
    %v71 = vlaneseq
    %v72 = vshrl.u32 %v71, 7
    %v73 = vsub.s32 0, %v72
    %v74 = vrot.slane %v69, %v73
    %v75 = vlaneseq
    %v76 = vshrl.u32 %v75, 7
    %v77 = vsub.s32 1, %v76
    %v78 = vrot.slane %v69, %v77
    %vm81 = vcmask 261120
    %v83 = vsel %vm81, %v57, 0
    %v86 = vsel %vm81, %v58, 0
    %v89 = vsel %vm81, %v59, 0
    %v92 = vsel %vm81, %v60, 0
    %94 = vmatprep.subr.mxu0 0.0
    %95 = vmatpush1.msra.mxu0 0.0
    %96 = vmatprep.subr.mxu0 0.0
    %97 = vmatpush1.msra.mxu0 0.0
    %98 = vmatprep.subr.mxu0 0.0
    %99 = vmatpush1.msra.mxu0 0.0
    %100 = vmatprep.subr.mxu0 0.0
    %101 = vmatpush1.msra.mxu0 0.0
    %102 = vmatprep.subr.mxu0 0.0
    %103 = vmatpush1.msra.mxu0 0.0
    %104 = vmatprep.subr.mxu0 0.0
    %105 = vmatpush1.msra.mxu0 0.0
    %106 = vmatprep.subr.mxu0 0.0
    %107 = vmatpush1.msra.mxu0 0.0
    %108 = vmatprep.subr.mxu0 0.0
    %109 = vmatpush1.msra.mxu0 0.0
    %110 = vmatprep.subr.mxu0 0.0
    %111 = vmatpush1.msra.mxu0 0.0
    %112 = vmatprep.subr.mxu0 0.0
    %113 = vmatpush1.msra.mxu0 0.0
    %114 = vmatprep.subr.mxu0 0.0
    %115 = vmatpush1.msra.mxu0 0.0
    %116 = vmatprep.subr.mxu0 0.0
    %117 = vmatpush1.msra.mxu0 0.0
    %118 = vmatprep.subr.mxu0 %v68
    %119 = vmatpush1.msra.mxu0 %v67
    %120 = vmatprep.subr.mxu0 %v66
    %121 = vmatpush1.msra.mxu0 %v65
    %122 = vmatprep.subr.mxu0 %v64
    %123 = vmatpush1.msra.mxu0 %v63
    %124 = vmatprep.subr.mxu0 %v62
    %125 = vmatpush1.msra.mxu0 %v61
    %126 = vmatprep.subr.mxu0 0.0
    %127 = vmatpush2.msra.mxu0 0.0
    %128 = vmatprep.subr.mxu0 0.0
    %129 = vmatpush2.msra.mxu0 0.0
    %130 = vmatprep.subr.mxu0 0.0
    %131 = vmatpush2.msra.mxu0 0.0
    %132 = vmatprep.subr.mxu0 0.0
    %133 = vmatpush2.msra.mxu0 0.0
    %134 = vmatprep.subr.mxu0 0.0
    %135 = vmatpush2.msra.mxu0 0.0
    %136 = vmatprep.subr.mxu0 0.0
    %137 = vmatpush2.msra.mxu0 0.0
    %138 = vmatprep.subr.mxu0 0.0
    %139 = vmatpush2.msra.mxu0 0.0
    %140 = vmatprep.subr.mxu0 0.0
    %141 = vmatpush2.msra.mxu0 0.0
    %142 = vmatprep.subr.mxu0 0.0
    %143 = vmatpush2.msra.mxu0 0.0
    %144 = vmatprep.subr.mxu0 0.0
    %145 = vmatpush2.msra.mxu0 0.0
    %146 = vmatprep.subr.mxu0 0.0
    %147 = vmatpush2.msra.mxu0 0.0
    %148 = vmatprep.subr.mxu0 0.0
    %149 = vmatpush2.msra.mxu0 0.0
    %150 = vmatprep.subr.mxu0 0.0
    %151 = vmatpush2.msra.mxu0 0.0
    %152 = vmatprep.subr.mxu0 0.0
    %153 = vmatpush2.msra.mxu0 0.0
    %154 = vmatprep.subr.mxu0 0.0
    %155 = vmatpush2.msra.mxu0 0.0
    %156 = vmatprep.subr.mxu0 0.0
    %157 = vmatpush2.msra.mxu0 0.0
    %158 = vmatprep.mubr.f32.mxu0 0.0
    %159 = vmatmul.mubr.f32.gmra.mxu0 %v83
    %v160 = vpop.f32.mrf.mxu0
    %v161 = vadd.f32 %v74, %v160
    %v162 = vpop.f32.mrf.mxu0
    %v163 = vadd.f32 %v78, %v162
    %164 = vmatprep.mubr.f32.mxu0 0.0
    %165 = vmatmul.mubr.f32.gmra.mxu0 %v86
    %v166 = vpop.f32.mrf.mxu0
    %v167 = vadd.f32 %v74, %v166
    %v168 = vpop.f32.mrf.mxu0
    %v169 = vadd.f32 %v78, %v168
    %170 = vmatprep.mubr.f32.mxu0 0.0
    %171 = vmatmul.mubr.f32.gmra.mxu0 %v89
    %v172 = vpop.f32.mrf.mxu0
    %v173 = vadd.f32 %v74, %v172
    %v174 = vpop.f32.mrf.mxu0
    %v175 = vadd.f32 %v78, %v174
    %176 = vmatprep.mubr.f32.mxu0 0.0
    %177 = vmatmul.mubr.f32.gmra.mxu0 %v92
    %v178 = vpop.f32.mrf.mxu0
    %v179 = vadd.f32 %v74, %v178
    %v180 = vpop.f32.mrf.mxu0
    %v181 = vadd.f32 %v78, %v180
    %182 = vdwg.mxu0
    %v183 = vld [vmem:[#allocation5] sm:$0x3]
    %v184 = vtanh.pop %v161
    %v185 = vtanh.pop %v167
    %v186 = vtanh.pop %v173
    %v187 = vtanh.pop %v179
    %v188 = vxor.u32 %v163, 2147483648
    %v189 = vxor.u32 %v169, 2147483648
    %v190 = vxor.u32 %v175, 2147483648
    %v191 = vxor.u32 %v181, 2147483648
    %v192 = vmul.f32 %v188, 1.442695
    %v193 = vpow.pop %v192
    %v194 = vmul.f32 %v189, 1.442695
    %v195 = vpow.pop %v194
    %v196 = vmul.f32 %v190, 1.442695
    %v197 = vpow.pop %v196
    %v198 = vmul.f32 %v191, 1.442695
    %v199 = vpow.pop %v198
    %v200 = vadd.f32 %v193, 1.0
    %v201 = vadd.f32 %v195, 1.0
    %v202 = vadd.f32 %v197, 1.0
    %v203 = vadd.f32 %v199, 1.0
    %v204 = vrcp.pop %v200
    %v205 = vmul.f32 1.0, %v204
    %v206 = vrcp.pop %v201
    %v207 = vmul.f32 1.0, %v206
    %v208 = vrcp.pop %v202
    %v209 = vmul.f32 1.0, %v208
    %v210 = vrcp.pop %v203
    %v211 = vmul.f32 1.0, %v210
    %v212 = vmul.f32 %v184, %v205
    %v213 = vmul.f32 %v185, %v207
    %v214 = vmul.f32 %v186, %v209
    %v215 = vmul.f32 %v187, %v211
    %v218 = vunpack.c.l.s4 1966171168
    %v219 = vunpack.c.0.s8 %v218
    %v220 = vlaneseq
    %v221 = vshrl.u32 %v220, 7
    %v222 = vsub.s32 %v219, %v221
    %v223 = vrot.slane %v183, %v222
    %v224 = vcombine.high %v223, %v223
    %v226 = vunpack.c.l.s4 1966171168
    %v227 = vunpack.c.0.s8 %v226
    %v228 = vlaneseq
    %v229 = vshrl.u32 %v228, 7
    %v230 = vsub.s32 %v227, %v229
    %v231 = vrot.slane %v223, %v230
    %v233 = vunpack.c.l.s4 1966171168
    %v234 = vunpack.c.0.s8 %v233
    %v235 = vlaneseq
    %v236 = vshrl.u32 %v235, 7
    %v237 = vsub.s32 %v234, %v236
    %v238 = vrot.slane %v224, %v237
    %v239 = vlaneseq
    %v240 = vshrl.u32 %v239, 7
    %v241 = vsub.s32 0, %v240
    %v242 = vrot.slane %v231, %v241
    %v243 = vlaneseq
    %v244 = vshrl.u32 %v243, 7
    %v245 = vsub.s32 0, %v244
    %v246 = vrot.slane %v238, %v245
    %v249 = vmul.f32 %v212, %v242
    %v250 = vmul.f32 %v213, %v242
    %v251 = vmul.f32 %v214, %v246
    %v252 = vmul.f32 %v215, %v246
    %253 = vadd.xlane.f32.xlu0 %v249
    %v254 = vpop.xlane.xlu0 %253
    %255 = vadd.xlane.f32.xlu0 %v250
    %v256 = vpop.xlane.xlu0 %255
    %257 = vadd.xlane.f32.xlu0 %v251
    %v258 = vpop.xlane.xlu0 %257
    %259 = vadd.xlane.f32.xlu0 %v252
    %v260 = vpop.xlane.xlu0 %259
    %v261 = vadd.f32 %v254, 0.0
    %v262 = vadd.f32 %v256, 0.0
    %v263 = vadd.f32 %v258, 0.0
    %v264 = vadd.f32 %v260, 0.0
    %v269 = vlaneseq
    %v270 = vand.u32 %v269, 127
    %v271 = vlaneseq
    %v272 = vshrl.u32 %v271, 7
    %v273 = vsub.s32 %v270, %v272
    %v274 = vrot.slane %v261, %v273
    %v275 = vadd.s32 %v270, 4294967288
    %v276 = vlaneseq
    %v277 = vshrl.u32 %v276, 7
    %v278 = vsub.s32 %v275, %v277
    %v279 = vrot.slane %v262, %v278
    %vm280 = vcmask 130112
    %v281 = vsel %vm280, %v279, %v274
    %v282 = vlaneseq
    %v283 = vshrl.u32 %v282, 7
    %v284 = vsub.s32 %v270, %v283
    %v285 = vrot.slane %v263, %v284
    %v286 = vlaneseq
    %v287 = vshrl.u32 %v286, 7
    %v288 = vsub.s32 %v275, %v287
    %v289 = vrot.slane %v264, %v288
    %v290 = vsel %vm280, %v289, %v285
    %vm291 = vcmask 1041409
    %v292 = vsel %vm291, %v290, %v281
    %vm294 = vcmask 123904
    %v295 = vsel %vm294, %v292, -inf
    %296 = vmax.xlane.f32.xlu0 %v295
    %v297 = vpop.xlane.xlu0 %296
    %v299 = vlaneseq
    %v300 = vshrl.u32 %v299, 7
    %v301 = vsub.s32 0, %v300
    %v302 = vrot.slane %v297, %v301
    %v303 = vlaneseq
    %v304 = vshrl.u32 %v303, 7
    %v305 = vsub.s32 1, %v304
    %v306 = vrot.slane %v297, %v305
    %v309 = vsub.f32 %v261, %v302
    %v310 = vsub.f32 %v262, %v302
    %v311 = vsub.f32 %v263, %v306
    %v312 = vsub.f32 %v264, %v306
    %v313 = vmul.f32 %v309, 1.442695
    %v314 = vpow.pop %v313
    %v315 = vmul.f32 %v310, 1.442695
    %v316 = vpow.pop %v315
    %v317 = vmul.f32 %v311, 1.442695
    %v318 = vpow.pop %v317
    %v319 = vmul.f32 %v312, 1.442695
    %v320 = vpow.pop %v319
    %325 = vset.pattern.permute.xlu0 0
    %326 = vperm.xlu0 %325, %v314
    %v327 = vpop.permute.xlu0 %326
    %328 = vset.pattern.permute.xlu0 0
    %329 = vperm.xlu0 %328, %v316
    %v330 = vpop.permute.xlu0 %329
    %331 = vset.pattern.permute.xlu0 0
    %332 = vperm.xlu0 %331, %v318
    %v333 = vpop.permute.xlu0 %332
    %334 = vset.pattern.permute.xlu0 0
    %335 = vperm.xlu0 %334, %v320
    %v336 = vpop.permute.xlu0 %335
    %v337 = vlaneseq
    %v338 = vshrl.u32 %v337, 7
    %v339 = vsub.s32 %v270, %v338
    %v340 = vrot.slane %v327, %v339
    %v341 = vlaneseq
    %v342 = vshrl.u32 %v341, 7
    %v343 = vsub.s32 %v275, %v342
    %v344 = vrot.slane %v330, %v343
    %v345 = vsel %vm280, %v344, %v340
    %v346 = vlaneseq
    %v347 = vshrl.u32 %v346, 7
    %v348 = vsub.s32 %v270, %v347
    %v349 = vrot.slane %v333, %v348
    %v350 = vlaneseq
    %v351 = vshrl.u32 %v350, 7
    %v352 = vsub.s32 %v275, %v351
    %v353 = vrot.slane %v336, %v352
    %v354 = vsel %vm280, %v353, %v349
    %v355 = vsel %vm291, %v354, %v345
    %v357 = vsel %vm294, %v355, 0.0
    %358 = vadd.xlane.f32.xlu0 %v357
    %v359 = vpop.xlane.xlu0 %358
    %v360 = vrcp.pop %v359
    %v362 = vlaneseq
    %v363 = vshrl.u32 %v362, 7
    %v364 = vsub.s32 0, %v363
    %v365 = vrot.slane %v360, %v364
    %v366 = vlaneseq
    %v367 = vshrl.u32 %v366, 7
    %v368 = vsub.s32 1, %v367
    %v369 = vrot.slane %v360, %v368
    %v372 = vmul.f32 %v314, %v365
    %v373 = vmul.f32 %v316, %v365
    %v374 = vmul.f32 %v318, %v369
    %v375 = vmul.f32 %v320, %v369
    %380 = vset.pattern.permute.xlu0 0
    %381 = vperm.xlu0 %380, %v372
    %v382 = vpop.permute.xlu0 %381
    %383 = vset.pattern.permute.xlu0 0
    %384 = vperm.xlu0 %383, %v373
    %v385 = vpop.permute.xlu0 %384
    %386 = vset.pattern.permute.xlu0 0
    %387 = vperm.xlu0 %386, %v374
    %v388 = vpop.permute.xlu0 %387
    %389 = vset.pattern.permute.xlu0 0
    %390 = vperm.xlu0 %389, %v375
    %v391 = vpop.permute.xlu0 %390
    %v392 = vlaneseq
    %v393 = vshrl.u32 %v392, 7
    %v394 = vsub.s32 %v270, %v393
    %v395 = vrot.slane %v382, %v394
    %v396 = vlaneseq
    %v397 = vshrl.u32 %v396, 7
    %v398 = vsub.s32 %v275, %v397
    %v399 = vrot.slane %v385, %v398
    %v400 = vsel %vm280, %v399, %v395
    %v401 = vlaneseq
    %v402 = vshrl.u32 %v401, 7
    %v403 = vsub.s32 %v270, %v402
    %v404 = vrot.slane %v388, %v403
    %v405 = vlaneseq
    %v406 = vshrl.u32 %v405, 7
    %v407 = vsub.s32 %v275, %v406
    %v408 = vrot.slane %v391, %v407
    %v409 = vsel %vm280, %v408, %v404
    %v410 = vsel %vm291, %v409, %v400
    %412 = vst.msk [vmem:[#allocation8] sm:$0x3] %vm294, %v410
    // Predicated region
    $region30: #{tpu_custom_call.1} parent=1 // pred_check
      _
    $region31: #{tpu_custom_call.1} parent=1 // pred_check_branch
      %414 = sbr.rel (0) target = $region33
    $region32: #{tpu_custom_call.1} parent=1 // pred_region
      %s416 = ssub.s32 32, 32
      %417 = vsyncadd [#allocation4], %s416
      %s419 = sshll.u32 [#allocation8], 4
      %s420 = int_to_ptr.vmem [resolvable:$true] %s419
      %422 = dma.vmem_to_hbm [thread:$0]  %s420, 32, %s4, [#allocation4]
    $region33: #{tpu_custom_call.1} parent=1 // pred_fallthru
      _
    // Predicated region
    $region34: #{tpu_custom_call.1} parent=1 // pred_check
      _
    $region35: #{tpu_custom_call.1} parent=1 // pred_check_branch
      %424 = sbr.rel (0) target = $region37
    $region36: #{tpu_custom_call.1} parent=1 // pred_region
      %425 = dma.done [#allocation4], 32
    $region37: #{tpu_custom_call.1} parent=1 // pred_fallthru
      _
    %426 = vsyncpa [#allocation3], 1
    %427 = vsyncpa [#allocation6], 1
    %428 = vsyncpa [#allocation4], 1

// kernel: tpu_custom_call.1
$region0: #{tpu_custom_call.1}
  #allocation0 [shape = 'u32[]', space=smem, size = 0x4, offset = 0x4, fixed_abs, tag = 'smem constant byte address 0x4 - core index']
  #allocation1 [shape = 'u32[144,128]{1,0:T(1,128)}', space=vmem, size = 0x12000, scoped, tag = 'internal scratch']
  %s0 = inlined_call_operand.hbm [shape: f32[2,16,32], index: 0, kind: input, shape index: {}]
  %s1 = inlined_call_operand.hbm [shape: f32[2,128], index: 1, kind: input, shape index: {}]
  %s2 = inlined_call_operand.hbm [shape: f32[32,256], index: 2, kind: input, shape index: {}]
  %s3 = inlined_call_operand.vmem [shape: f32[1,256], index: 3, kind: input, shape index: {}]
  %s4 = inlined_call_operand.hbm [shape: f32[2,16], index: 4, kind: output, shape index: {}]
  %s5 = sld [smem:[#allocation0]]
  $region38: #{tpu_custom_call.1} parent=0
    _
  %s7 = ssub.s32 1, %s5
  %s8 = scalar_select 0, %s7, %s5
  $region1: #{tpu_custom_call.1} parent=0
    #allocation2 [shape = 'u8[16384]{0}', space=vmem, size = 0x4000, scoped, tag = 'input window, operand 0, single buffered']
    #allocation3 [shape = 's32[1]{0}', space=sflag, size = 0x4, scoped, tag = 'scoped memory for tpu_custom_call.1']
    #allocation4 [shape = 's32[1]{0}', space=sflag, size = 0x4, scoped, tag = 'scoped memory for tpu_custom_call.1']
    #allocation5 [shape = 'u8[1024]{0}', space=vmem, size = 0x400, scoped, tag = 'input window, operand 1, single buffered']
    #allocation6 [shape = 's32[1]{0}', space=sflag, size = 0x4, scoped, tag = 'scoped memory for tpu_custom_call.1']
    #allocation7 [shape = 'u8[32768]{0}', space=vmem, size = 0x8000, scoped, tag = 'input window, operand 2, single buffered']
    #allocation8 [shape = 'u8[1024]{0}', space=vmem, size = 0x400, scoped, tag = 'output window, operand 0, single buffered']
    %9 = vsyncpa [#allocation3], 0
    %10 = vsyncpa [#allocation6], 0
    %11 = vsyncpa [#allocation4], 0
    // Predicated region
    $region2: #{tpu_custom_call.1} parent=1 // pred_check
      _
    $region3: #{tpu_custom_call.1} parent=1 // pred_check_branch
      %13 = sbr.rel (0) target = $region5
    $region4: #{tpu_custom_call.1} parent=1 // pred_region
      %s15 = ssub.s32 512, 512
      %16 = vsyncadd [#allocation3], %s15
      %s17 = sshll.u32 [#allocation2], 4
      %s18 = int_to_ptr.vmem [resolvable:$true] %s17
      %23 = dma.hbm_to_vmem [thread:$0]  %s0, 512, %s18, [#allocation3], 128, 128, 8
    $region5: #{tpu_custom_call.1} parent=1 // pred_fallthru
      _
    // Predicated region
    $region6: #{tpu_custom_call.1} parent=1 // pred_check
      _
    $region7: #{tpu_custom_call.1} parent=1 // pred_check_branch
      %25 = sbr.rel (0) target = $region9
    $region8: #{tpu_custom_call.1} parent=1 // pred_region
      %s27 = ssub.s32 32, 32
      %28 = vsyncadd [#allocation6], %s27
      %s30 = sshll.u32 [#allocation5], 4
      %s31 = int_to_ptr.vmem [resolvable:$true] %s30
      %33 = dma.hbm_to_vmem [thread:$0]  %s1, 32, %s31, [#allocation6]
    $region9: #{tpu_custom_call.1} parent=1 // pred_fallthru
      _
    // Predicated region
    $region10: #{tpu_custom_call.1} parent=1 // pred_check
      _
    $region11: #{tpu_custom_call.1} parent=1 // pred_check_branch
      %35 = sbr.rel (0) target = $region13
    $region12: #{tpu_custom_call.1} parent=1 // pred_region
      %s37 = ssub.s32 1024, 1024
      %38 = vsyncadd [#allocation6], %s37
      %s39 = sshll.u32 [#allocation7], 4
      %s40 = int_to_ptr.vmem [resolvable:$true] %s39
      %45 = dma.hbm_to_vmem [thread:$0]  %s2, 1024, %s40, [#allocation6], 256, 256, 16
    $region13: #{tpu_custom_call.1} parent=1 // pred_fallthru
      _
    // Predicated region
    $region14: #{tpu_custom_call.1} parent=1 // pred_check
      _
    $region15: #{tpu_custom_call.1} parent=1 // pred_check_branch
      %47 = sbr.rel (0) target = $region17
    $region16: #{tpu_custom_call.1} parent=1 // pred_region
      _
    $region17: #{tpu_custom_call.1} parent=1 // pred_fallthru
      _
    // Predicated region
    $region18: #{tpu_custom_call.1} parent=1 // pred_check
      _
    $region19: #{tpu_custom_call.1} parent=1 // pred_check_branch
      %49 = sbr.rel (0) target = $region21
    $region20: #{tpu_custom_call.1} parent=1 // pred_region
      %50 = dma.done [#allocation3], 512
    $region21: #{tpu_custom_call.1} parent=1 // pred_fallthru
      _
    // Predicated region
    $region22: #{tpu_custom_call.1} parent=1 // pred_check
      _
    $region23: #{tpu_custom_call.1} parent=1 // pred_check_branch
      %52 = sbr.rel (0) target = $region25
    $region24: #{tpu_custom_call.1} parent=1 // pred_region
      %53 = dma.done [#allocation6], 32
    $region25: #{tpu_custom_call.1} parent=1 // pred_fallthru
      _
    // Predicated region
    $region26: #{tpu_custom_call.1} parent=1 // pred_check
      _
    $region27: #{tpu_custom_call.1} parent=1 // pred_check_branch
      %55 = sbr.rel (0) target = $region29
    $region28: #{tpu_custom_call.1} parent=1 // pred_region
      %56 = dma.done [#allocation6], 1024
    $region29: #{tpu_custom_call.1} parent=1 // pred_fallthru
      _
    %v57 = vld [vmem:[#allocation2] sm:$0xff]
    %v58 = vld [vmem:[#allocation2 + $0x8] sm:$0xff]
    %v59 = vld [vmem:[#allocation2 + $0x10] sm:$0xff]
    %v60 = vld [vmem:[#allocation2 + $0x18] sm:$0xff]
    %v61 = vld [vmem:[#allocation7] sm:$0xff]
    %v62 = vld [vmem:[#allocation7 + $0x8] sm:$0xff]
    %v63 = vld [vmem:[#allocation7 + $0x10] sm:$0xff]
    %v64 = vld [vmem:[#allocation7 + $0x18] sm:$0xff]
    %v65 = vld [vmem:[#allocation7 + $0x20] sm:$0xff]
    %v66 = vld [vmem:[#allocation7 + $0x28] sm:$0xff]
    %v67 = vld [vmem:[#allocation7 + $0x30] sm:$0xff]
    %v68 = vld [vmem:[#allocation7 + $0x38] sm:$0xff]
    %v69 = vld [vmem:[%s3] sm:$0x3]
    %v71 = vlaneseq
    %v72 = vshrl.u32 %v71, 7
    %v73 = vsub.s32 0, %v72
    %v74 = vrot.slane %v69, %v73
    %v75 = vlaneseq
    %v76 = vshrl.u32 %v75, 7
    %v77 = vsub.s32 1, %v76
    %v78 = vrot.slane %v69, %v77
    %vm81 = vcmask 261120
    %v83 = vsel %vm81, %v57, 0
    %v86 = vsel %vm81, %v58, 0
    %v89 = vsel %vm81, %v59, 0
    %v92 = vsel %vm81, %v60, 0
    %94 = vmatprep.subr.mxu0 0.0
    %95 = vmatpush1.msra.mxu0 0.0
    %96 = vmatprep.subr.mxu0 0.0
    %97 = vmatpush1.msra.mxu0 0.0
    %98 = vmatprep.subr.mxu0 0.0
    %99 = vmatpush1.msra.mxu0 0.0
    %100 = vmatprep.subr.mxu0 0.0
    %101 = vmatpush1.msra.mxu0 0.0
    %102 = vmatprep.subr.mxu0 0.0
    %103 = vmatpush1.msra.mxu0 0.0
    %104 = vmatprep.subr.mxu0 0.0
    %105 = vmatpush1.msra.mxu0 0.0
    %106 = vmatprep.subr.mxu0 0.0
    %107 = vmatpush1.msra.mxu0 0.0
    %108 = vmatprep.subr.mxu0 0.0
    %109 = vmatpush1.msra.mxu0 0.0
    %110 = vmatprep.subr.mxu0 0.0
    %111 = vmatpush1.msra.mxu0 0.0
    %112 = vmatprep.subr.mxu0 0.0
    %113 = vmatpush1.msra.mxu0 0.0
    %114 = vmatprep.subr.mxu0 0.0
    %115 = vmatpush1.msra.mxu0 0.0
    %116 = vmatprep.subr.mxu0 0.0
    %117 = vmatpush1.msra.mxu0 0.0
    %118 = vmatprep.subr.mxu0 %v68
    %119 = vmatpush1.msra.mxu0 %v67
    %120 = vmatprep.subr.mxu0 %v66
    %121 = vmatpush1.msra.mxu0 %v65
    %122 = vmatprep.subr.mxu0 %v64
    %123 = vmatpush1.msra.mxu0 %v63
    %124 = vmatprep.subr.mxu0 %v62
    %125 = vmatpush1.msra.mxu0 %v61
    %126 = vmatprep.subr.mxu0 0.0
    %127 = vmatpush2.msra.mxu0 0.0
    %128 = vmatprep.subr.mxu0 0.0
    %129 = vmatpush2.msra.mxu0 0.0
    %130 = vmatprep.subr.mxu0 0.0
    %131 = vmatpush2.msra.mxu0 0.0
    %132 = vmatprep.subr.mxu0 0.0
    %133 = vmatpush2.msra.mxu0 0.0
    %134 = vmatprep.subr.mxu0 0.0
    %135 = vmatpush2.msra.mxu0 0.0
    %136 = vmatprep.subr.mxu0 0.0
    %137 = vmatpush2.msra.mxu0 0.0
    %138 = vmatprep.subr.mxu0 0.0
    %139 = vmatpush2.msra.mxu0 0.0
    %140 = vmatprep.subr.mxu0 0.0
    %141 = vmatpush2.msra.mxu0 0.0
    %142 = vmatprep.subr.mxu0 0.0
    %143 = vmatpush2.msra.mxu0 0.0
    %144 = vmatprep.subr.mxu0 0.0
    %145 = vmatpush2.msra.mxu0 0.0
    %146 = vmatprep.subr.mxu0 0.0
    %147 = vmatpush2.msra.mxu0 0.0
    %148 = vmatprep.subr.mxu0 0.0
    %149 = vmatpush2.msra.mxu0 0.0
    %150 = vmatprep.subr.mxu0 0.0
    %151 = vmatpush2.msra.mxu0 0.0
    %152 = vmatprep.subr.mxu0 0.0
    %153 = vmatpush2.msra.mxu0 0.0
    %154 = vmatprep.subr.mxu0 0.0
    %155 = vmatpush2.msra.mxu0 0.0
    %156 = vmatprep.subr.mxu0 0.0
    %157 = vmatpush2.msra.mxu0 0.0
    %158 = vmatprep.mubr.f32.mxu0 0.0
    %159 = vmatmul.mubr.f32.gmra.mxu0 %v83
    %v160 = vpop.f32.mrf.mxu0
    %v161 = vadd.f32 %v74, %v160
    %v162 = vpop.f32.mrf.mxu0
    %v163 = vadd.f32 %v78, %v162
    %164 = vmatprep.mubr.f32.mxu0 0.0
    %165 = vmatmul.mubr.f32.gmra.mxu0 %v86
    %v166 = vpop.f32.mrf.mxu0
    %v167 = vadd.f32 %v74, %v166
    %v168 = vpop.f32.mrf.mxu0
    %v169 = vadd.f32 %v78, %v168
    %170 = vmatprep.mubr.f32.mxu0 0.0
    %171 = vmatmul.mubr.f32.gmra.mxu0 %v89
    %v172 = vpop.f32.mrf.mxu0
    %v173 = vadd.f32 %v74, %v172
    %v174 = vpop.f32.mrf.mxu0
    %v175 = vadd.f32 %v78, %v174
    %176 = vmatprep.mubr.f32.mxu0 0.0
    %177 = vmatmul.mubr.f32.gmra.mxu0 %v92
    %v178 = vpop.f32.mrf.mxu0
    %v179 = vadd.f32 %v74, %v178
    %v180 = vpop.f32.mrf.mxu0
    %v181 = vadd.f32 %v78, %v180
    %182 = vdwg.mxu0
    %v183 = vld [vmem:[#allocation5] sm:$0x3]
    %v184 = vtanh.pop %v161
    %v185 = vtanh.pop %v167
    %v186 = vtanh.pop %v173
    %v187 = vtanh.pop %v179
    %v188 = vxor.u32 %v163, 2147483648
    %v189 = vxor.u32 %v169, 2147483648
    %v190 = vxor.u32 %v175, 2147483648
    %v191 = vxor.u32 %v181, 2147483648
    %v192 = vmul.f32 %v188, 1.442695
    %v193 = vpow.pop %v192
    %v194 = vmul.f32 %v189, 1.442695
    %v195 = vpow.pop %v194
    %v196 = vmul.f32 %v190, 1.442695
    %v197 = vpow.pop %v196
    %v198 = vmul.f32 %v191, 1.442695
    %v199 = vpow.pop %v198
    %v200 = vadd.f32 %v193, 1.0
    %v201 = vadd.f32 %v195, 1.0
    %v202 = vadd.f32 %v197, 1.0
    %v203 = vadd.f32 %v199, 1.0
    %v204 = vrcp.pop %v200
    %v205 = vmul.f32 1.0, %v204
    %v206 = vrcp.pop %v201
    %v207 = vmul.f32 1.0, %v206
    %v208 = vrcp.pop %v202
    %v209 = vmul.f32 1.0, %v208
    %v210 = vrcp.pop %v203
    %v211 = vmul.f32 1.0, %v210
    %v212 = vmul.f32 %v184, %v205
    %v213 = vmul.f32 %v185, %v207
    %v214 = vmul.f32 %v186, %v209
    %v215 = vmul.f32 %v187, %v211
    %v218 = vunpack.c.l.s4 1966171168
    %v219 = vunpack.c.0.s8 %v218
    %v220 = vlaneseq
    %v221 = vshrl.u32 %v220, 7
    %v222 = vsub.s32 %v219, %v221
    %v223 = vrot.slane %v183, %v222
    %v224 = vcombine.high %v223, %v223
    %v226 = vunpack.c.l.s4 1966171168
    %v227 = vunpack.c.0.s8 %v226
    %v228 = vlaneseq
    %v229 = vshrl.u32 %v228, 7
    %v230 = vsub.s32 %v227, %v229
    %v231 = vrot.slane %v223, %v230
    %v233 = vunpack.c.l.s4 1966171168
    %v234 = vunpack.c.0.s8 %v233
    %v235 = vlaneseq
    %v236 = vshrl.u32 %v235, 7
    %v237 = vsub.s32 %v234, %v236
    %v238 = vrot.slane %v224, %v237
    %v239 = vlaneseq
    %v240 = vshrl.u32 %v239, 7
    %v241 = vsub.s32 0, %v240
    %v242 = vrot.slane %v231, %v241
    %v243 = vlaneseq
    %v244 = vshrl.u32 %v243, 7
    %v245 = vsub.s32 0, %v244
    %v246 = vrot.slane %v238, %v245
    %v249 = vmul.f32 %v212, %v242
    %v250 = vmul.f32 %v213, %v242
    %v251 = vmul.f32 %v214, %v246
    %v252 = vmul.f32 %v215, %v246
    %253 = vadd.xlane.f32.xlu0 %v249
    %v254 = vpop.xlane.xlu0 %253
    %255 = vadd.xlane.f32.xlu0 %v250
    %v256 = vpop.xlane.xlu0 %255
    %257 = vadd.xlane.f32.xlu0 %v251
    %v258 = vpop.xlane.xlu0 %257
    %259 = vadd.xlane.f32.xlu0 %v252
    %v260 = vpop.xlane.xlu0 %259
    %v261 = vadd.f32 %v254, 0.0
    %v262 = vadd.f32 %v256, 0.0
    %v263 = vadd.f32 %v258, 0.0
    %v264 = vadd.f32 %v260, 0.0
    %v269 = vlaneseq
    %v270 = vand.u32 %v269, 127
    %v271 = vlaneseq
    %v272 = vshrl.u32 %v271, 7
    %v273 = vsub.s32 %v270, %v272
    %v274 = vrot.slane %v261, %v273
    %v275 = vadd.s32 %v270, 4294967288
    %v276 = vlaneseq
    %v277 = vshrl.u32 %v276, 7
    %v278 = vsub.s32 %v275, %v277
    %v279 = vrot.slane %v262, %v278
    %vm280 = vcmask 130112
    %v281 = vsel %vm280, %v279, %v274
    %v282 = vlaneseq
    %v283 = vshrl.u32 %v282, 7
    %v284 = vsub.s32 %v270, %v283
    %v285 = vrot.slane %v263, %v284
    %v286 = vlaneseq
    %v287 = vshrl.u32 %v286, 7
    %v288 = vsub.s32 %v275, %v287
    %v289 = vrot.slane %v264, %v288
    %v290 = vsel %vm280, %v289, %v285
    %vm291 = vcmask 1041409
    %v292 = vsel %vm291, %v290, %v281
    %vm294 = vcmask 123904
    %v295 = vsel %vm294, %v292, -inf
    %296 = vmax.xlane.f32.xlu0 %v295
    %v297 = vpop.xlane.xlu0 %296
    %v299 = vlaneseq
    %v300 = vshrl.u32 %v299, 7
    %v301 = vsub.s32 0, %v300
    %v302 = vrot.slane %v297, %v301
    %v303 = vlaneseq
    %v304 = vshrl.u32 %v303, 7
    %v305 = vsub.s32 1, %v304
    %v306 = vrot.slane %v297, %v305
    %v309 = vsub.f32 %v261, %v302
    %v310 = vsub.f32 %v262, %v302
    %v311 = vsub.f32 %v263, %v306
    %v312 = vsub.f32 %v264, %v306
    %v313 = vmul.f32 %v309, 1.442695
    %v314 = vpow.pop %v313
    %v315 = vmul.f32 %v310, 1.442695
    %v316 = vpow.pop %v315
    %v317 = vmul.f32 %v311, 1.442695
    %v318 = vpow.pop %v317
    %v319 = vmul.f32 %v312, 1.442695
    %v320 = vpow.pop %v319
    %325 = vset.pattern.permute.xlu0 0
    %326 = vperm.xlu0 %325, %v314
    %v327 = vpop.permute.xlu0 %326
    %328 = vset.pattern.permute.xlu0 0
    %329 = vperm.xlu0 %328, %v316
    %v330 = vpop.permute.xlu0 %329
    %331 = vset.pattern.permute.xlu0 0
    %332 = vperm.xlu0 %331, %v318
    %v333 = vpop.permute.xlu0 %332
    %334 = vset.pattern.permute.xlu0 0
    %335 = vperm.xlu0 %334, %v320
    %v336 = vpop.permute.xlu0 %335
    %v337 = vlaneseq
    %v338 = vshrl.u32 %v337, 7
    %v339 = vsub.s32 %v270, %v338
    %v340 = vrot.slane %v327, %v339
    %v341 = vlaneseq
    %v342 = vshrl.u32 %v341, 7
    %v343 = vsub.s32 %v275, %v342
    %v344 = vrot.slane %v330, %v343
    %v345 = vsel %vm280, %v344, %v340
    %v346 = vlaneseq
    %v347 = vshrl.u32 %v346, 7
    %v348 = vsub.s32 %v270, %v347
    %v349 = vrot.slane %v333, %v348
    %v350 = vlaneseq
    %v351 = vshrl.u32 %v350, 7
    %v352 = vsub.s32 %v275, %v351
    %v353 = vrot.slane %v336, %v352
    %v354 = vsel %vm280, %v353, %v349
    %v355 = vsel %vm291, %v354, %v345
    %v357 = vsel %vm294, %v355, 0.0
    %358 = vadd.xlane.f32.xlu0 %v357
    %v359 = vpop.xlane.xlu0 %358
    %v360 = vrcp.pop %v359
    %v362 = vlaneseq
    %v363 = vshrl.u32 %v362, 7
    %v364 = vsub.s32 0, %v363
    %v365 = vrot.slane %v360, %v364
    %v366 = vlaneseq
    %v367 = vshrl.u32 %v366, 7
    %v368 = vsub.s32 1, %v367
    %v369 = vrot.slane %v360, %v368
    %v372 = vmul.f32 %v314, %v365
    %v373 = vmul.f32 %v316, %v365
    %v374 = vmul.f32 %v318, %v369
    %v375 = vmul.f32 %v320, %v369
    %380 = vset.pattern.permute.xlu0 0
    %381 = vperm.xlu0 %380, %v372
    %v382 = vpop.permute.xlu0 %381
    %383 = vset.pattern.permute.xlu0 0
    %384 = vperm.xlu0 %383, %v373
    %v385 = vpop.permute.xlu0 %384
    %386 = vset.pattern.permute.xlu0 0
    %387 = vperm.xlu0 %386, %v374
    %v388 = vpop.permute.xlu0 %387
    %389 = vset.pattern.permute.xlu0 0
    %390 = vperm.xlu0 %389, %v375
    %v391 = vpop.permute.xlu0 %390
    %v392 = vlaneseq
    %v393 = vshrl.u32 %v392, 7
    %v394 = vsub.s32 %v270, %v393
    %v395 = vrot.slane %v382, %v394
    %v396 = vlaneseq
    %v397 = vshrl.u32 %v396, 7
    %v398 = vsub.s32 %v275, %v397
    %v399 = vrot.slane %v385, %v398
    %v400 = vsel %vm280, %v399, %v395
    %v401 = vlaneseq
    %v402 = vshrl.u32 %v401, 7
    %v403 = vsub.s32 %v270, %v402
    %v404 = vrot.slane %v388, %v403
    %v405 = vlaneseq
    %v406 = vshrl.u32 %v405, 7
    %v407 = vsub.s32 %v275, %v406
    %v408 = vrot.slane %v391, %v407
    %v409 = vsel %vm280, %v408, %v404
    %v410 = vsel %vm291, %v409, %v400
    %412 = vst.msk [vmem:[#allocation8] sm:$0x3] %vm294, %v410
    // Predicated region
    $region30: #{tpu_custom_call.1} parent=1 // pred_check
      _
    $region31: #{tpu_custom_call.1} parent=1 // pred_check_branch
      %414 = sbr.rel (0) target = $region33
    $region32: #{tpu_custom_call.1} parent=1 // pred_region
      %s416 = ssub.s32 32, 32
      %417 = vsyncadd [#allocation4], %s416
      %s419 = sshll.u32 [#allocation8], 4
      %s420 = int_to_ptr.vmem [resolvable:$true] %s419
      %422 = dma.vmem_to_hbm [thread:$0]  %s420, 32, %s4, [#allocation4]
    $region33: #{tpu_custom_call.1} parent=1 // pred_fallthru
      _
    // Predicated region
    $region34: #{tpu_custom_call.1} parent=1 // pred_check
      _
    $region35: #{tpu_custom_call.1} parent=1 // pred_check_branch
      %424 = sbr.rel (0) target = $region37
    $region36: #{tpu_custom_call.1} parent=1 // pred_region
      %425 = dma.done [#allocation4], 32
    $region37: #{tpu_custom_call.1} parent=1 // pred_fallthru
      _
    %426 = vsyncpa [#allocation3], 1
    %427 = vsyncpa [#allocation6], 1
    %428 = vsyncpa [#allocation4], 1

</llo_original>
